<compile_context>
chip_gen: v7x
topology: tpu7x:2x2x1
jax: 0.10.0
libtpu: 0.0.40
codegen_flags: <defaults>
</compile_context>

<pallas_src>
import jax
import jax.numpy as jnp
from jax.experimental import pallas as pl
from jax.experimental.pallas import tpu as pltpu


# ---------------------------------------------------------------------------
# Pallas kernel: elementwise prefix average, computed once at (L, D2).
# ---------------------------------------------------------------------------
def _avg_prefix_kernel(emb_share_ref, emb_k_ref, out_ref):
    # (L, TD2) VMEM tiles.  Compute in fp32 (v5e VPU has no bf16 ALU), cast on store.
    a = emb_share_ref[...].astype(jnp.float32)
    b = emb_k_ref[...].astype(jnp.float32)
    out_ref[...] = ((a + b) * 0.5).astype(out_ref.dtype)


def _vmem_budget_bytes():
    """Per-generation VMEM byte budget for the pipeline (3 arrays, double-buffered)."""
    try:
        cap = pltpu.get_tpu_info().vmem_capacity_bytes     # v5e/v6e: 128 MiB, v7x: 64 MiB
    except Exception:
        cap = 64 << 20                                     # conservative fallback
    # ~3/8 of physical VMEM for the pipeline buffers, clamped to [8, 48] MiB.
    return min(48 << 20, max(8 << 20, (cap * 3) // 8))


def _default_min_steps():
    """>=2 grid steps on v7x so the 'parallel' axis can shard across its 2 TCs."""
    try:
        kind = jax.devices()[0].device_kind.lower()
        if "v7" in kind:
            return 2
    except Exception:
        pass
    return 1


def _choose_d2_tile(L, d2, itemsize, *, budget_bytes, min_steps):
    """Largest multiple-of-128 lane tile fitting the VMEM budget.

    budget covers: (2 inputs + 1 output) x double buffering = 6 blocks.
    """
    per_block = budget_bytes // 6
    max_lanes = per_block // max(1, L * itemsize)
    td2 = max(128, (max_lanes // 128) * 128)
    td2 = min(td2, d2)
    if min_steps > 1 and d2 >= 128 * min_steps:
        cap = max(128, ((d2 // min_steps) // 128) * 128)
        td2 = min(td2, cap)
    return td2


def averaged_prefix(emb_share, emb_k, *, out_dtype=None, use_pallas=None):
    """Returns (L, D2) = (emb_share + emb_k) / 2, computed once (no batch dim)."""
    L, D2 = emb_share.shape
    assert emb_k.shape == (L, D2)
    out_dtype = out_dtype if out_dtype is not None else emb_share.dtype

    # Tiny-config dispatch: below ~1 MiB total the pallas_call launch overhead
    # and fusion barrier make plain XLA strictly faster.
    total_bytes = 3 * L * D2 * jnp.dtype(emb_share.dtype).itemsize
    if use_pallas is None:
        use_pallas = total_bytes >= (1 << 20)
    if not use_pallas:
        a = emb_share.astype(jnp.float32)
        b = emb_k.astype(jnp.float32)
        return ((a + b) * 0.5).astype(out_dtype)

    itemsize = max(jnp.dtype(emb_share.dtype).itemsize,
                   jnp.dtype(out_dtype).itemsize, 4)
    budget = _vmem_budget_bytes()
    td2 = _choose_d2_tile(L, D2, itemsize,
                          budget_bytes=budget,
                          min_steps=_default_min_steps())
    grid = (pl.cdiv(D2, td2),)            # partial last block is masked by Pallas

    return pl.pallas_call(
        _avg_prefix_kernel,
        out_shape=jax.ShapeDtypeStruct((L, D2), out_dtype),
        grid_spec=pltpu.PrefetchScalarGridSpec(
            num_scalar_prefetch=0,
            grid=grid,
            in_specs=[
                pl.BlockSpec((L, td2), lambda d: (0, d)),
                pl.BlockSpec((L, td2), lambda d: (0, d)),
            ],
            out_specs=pl.BlockSpec((L, td2), lambda d: (0, d)),
        ),
        compiler_params=pltpu.CompilerParams(
            dimension_semantics=("parallel",),
            vmem_limit_bytes=min(budget + (8 << 20), 56 << 20)),
    )(emb_share, emb_k)


# ---------------------------------------------------------------------------
# Forward: prefix construction of PrefixShareMLM (case `k in pre_seq_len`).
# ---------------------------------------------------------------------------
def prefix_share_forward(emb_share, emb_k, attention_mask,
                         n_layer, n_head, n_embd, *,
                         out_dtype=None, use_pallas=None):
    """JAX equivalent of PrefixShareMLM prefix construction.

    Args:
      emb_share, emb_k: (L, 2*n_layer*hidden) PrefixEncoder embedding tables
                        (prefix_tokens == arange(L), so the gather is identity).
      attention_mask:   (B, S)
    Returns:
      past_key_values_avg: tuple of n_layer arrays, each (2, B, n_head, L, n_embd)
      attention_mask:      (B, L_share + S)
    """
    B = attention_mask.shape[0]
    L = emb_share.shape[0]

    # Hot path: prefix averaging at (L, D2) — lane-dense, computed exactly once.
    pkv = averaged_prefix(emb_share, emb_k,
                          out_dtype=out_dtype, use_pallas=use_pallas)   # (L, D2)

    # Glue (layout plumbing, plain JAX): reshape + permute FIRST at un-broadcast
    # size, THEN add the (virtual) batch axis.  Equivalent to the module's
    # view(B,L,2n,H,E).permute(2,0,3,1,4) but ~Bx cheaper to materialize.
    pkv = pkv.reshape(L, n_layer * 2, n_head, n_embd)
    pkv = jnp.transpose(pkv, (1, 2, 0, 3))                              # (2n, H, L, E)
    pkv = jnp.broadcast_to(pkv[:, None], (n_layer * 2, B, n_head, L, n_embd))
    past_key_values_avg = tuple(
        pkv[2 * i: 2 * i + 2] for i in range(n_layer))                  # split(2)

    prefix_mask = jnp.ones((B, L), dtype=attention_mask.dtype)
    attention_mask = jnp.concatenate([prefix_mask, attention_mask], axis=1)
    return past_key_values_avg, attention_mask


if __name__ == "__main__":
    # Small config consistent with the module:
    #   hidden_size=32, num_hidden_layers=2, num_attention_heads=4
    #   pre_seq_len = {'share': 8, 'taskA': 8}, batch=2, seq=8
    batch_size = 2
    seq_len = 8
    pre_seq_len = 8
    hidden_size = 32
    n_layer = 2
    n_head = 4
    n_embd = hidden_size // n_head
    D2 = n_layer * 2 * hidden_size                                      # 128

    key = jax.random.PRNGKey(0)
    k_share, k_task = jax.random.split(key, 2)

    # PrefixEncoder (prefix_projection=False): Embedding(pre_seq_len, 2*layers*hidden)
    emb_share = jax.random.normal(k_share, (pre_seq_len, D2), dtype=jnp.float32)
    emb_task = jax.random.normal(k_task, (pre_seq_len, D2), dtype=jnp.float32)
    attention_mask = jnp.ones((batch_size, seq_len), dtype=jnp.float32)

    # Force the Pallas path so the kernel is exercised once even at toy size
    # (auto-dispatch would pick plain jnp here).
    pkv_avg, attn_mask = prefix_share_forward(
        emb_share, emb_task, attention_mask, n_layer, n_head, n_embd,
        use_pallas=True)
    jax.block_until_ready(pkv_avg)
    jax.block_until_ready(attn_mask)

    # Reference check in plain JAX, following the original torch ordering
    # (broadcast -> view -> permute -> split).
    ref = (emb_share + emb_task) / 2.0
    ref = jnp.broadcast_to(ref[None], (batch_size, pre_seq_len, D2))
    ref = ref.reshape(batch_size, pre_seq_len, n_layer * 2, n_head, n_embd)
    ref = jnp.transpose(ref, (2, 0, 3, 1, 4))
    ok = True
    for i in range(n_layer):
        ok &= bool(jnp.allclose(pkv_avg[i], ref[2 * i: 2 * i + 2], atol=1e-6))
    expected_mask_shape = (batch_size, pre_seq_len + seq_len)
    ok &= attn_mask.shape == expected_mask_shape
    ok &= pkv_avg[0].shape == (2, batch_size, n_head, pre_seq_len, n_embd)
    ok &= bool(jnp.all(attn_mask[:, :pre_seq_len] == 1.0))

    if ok:
        print("KERNEL_OK")
    else:
        raise SystemExit("mismatch")
</pallas_src>

<mosaic_0001>
module attributes {stable_mosaic.version = 11 : i64} {
  func.func @_avg_prefix_kernel(%arg0: i32, %arg1: memref<8x128xf32, #tpu.memory_space<vmem>>, %arg2: memref<8x128xf32, #tpu.memory_space<vmem>>, %arg3: memref<8x128xf32, #tpu.memory_space<vmem>>) attributes {dimension_semantics = [#tpu.dimension_semantics<parallel>], iteration_bounds = array<i64: 1>, scalar_prefetch = 0 : i64, scratch_operands = 0 : i64, tpu.core_type = #tpu.core_type<tc>, window_params = [{transform_indices = @transform_0, window_bounds = array<i64: 8, 128>}, {transform_indices = @transform_1, window_bounds = array<i64: 8, 128>}, {transform_indices = @transform_2, window_bounds = array<i64: 8, 128>}]} {
    %c0 = arith.constant 0 : index
    %c0_0 = arith.constant 0 : index
    %0 = vector.load %arg1[%c0, %c0_0] : memref<8x128xf32, #tpu.memory_space<vmem>>, vector<8x128xf32>
    %c0_1 = arith.constant 0 : index
    %c0_2 = arith.constant 0 : index
    %1 = vector.load %arg2[%c0_1, %c0_2] : memref<8x128xf32, #tpu.memory_space<vmem>>, vector<8x128xf32>
    %2 = arith.addf %0, %1 : vector<8x128xf32>
    %cst = arith.constant 5.000000e-01 : f32
    %3 = vector.broadcast %cst : f32 to vector<8x128xf32>
    %4 = arith.mulf %2, %3 : vector<8x128xf32>
    %c0_3 = arith.constant 0 : index
    %c0_4 = arith.constant 0 : index
    %5 = vector.load %arg3[%c0_3, %c0_4] : memref<8x128xf32, #tpu.memory_space<vmem>>, vector<8x128xf32>
    tpu.vector_store %arg3[%c0_3, %c0_4], %4 {strides = array<i32>} : memref<8x128xf32, #tpu.memory_space<vmem>>, vector<8x128xf32>,
    return
  }
  func.func @transform_0(%arg0: i32) -> (i32, i32) {
    %c0_i32 = arith.constant 0 : i32
    %c0_i32_0 = arith.constant 0 : i32
    return %c0_i32, %arg0 : i32, i32
  }
  func.func @transform_1(%arg0: i32) -> (i32, i32) {
    %c0_i32 = arith.constant 0 : i32
    %c0_i32_0 = arith.constant 0 : i32
    return %c0_i32, %arg0 : i32, i32
  }
  func.func @transform_2(%arg0: i32) -> (i32, i32) {
    %c0_i32 = arith.constant 0 : i32
    %c0_i32_0 = arith.constant 0 : i32
    return %c0_i32, %arg0 : i32, i32
  }
}

</mosaic_0001>

<llo_original>
// kernel: tpu_custom_call.1
$region0: #{tpu_custom_call.1}
  #allocation0 [shape = 'u32[]', space=smem, size = 0x4, offset = 0x4, fixed_abs, tag = 'smem constant byte address 0x4 - core index']
  #allocation1 [shape = 'u32[144,128]{1,0:T(1,128)}', space=vmem, size = 0x12000, scoped, tag = 'internal scratch']
  %s0 = inlined_call_operand.hbm [shape: f32[8,128], index: 0, kind: input, shape index: {}]
  %s1 = inlined_call_operand.hbm [shape: f32[8,128], index: 1, kind: input, shape index: {}]
  %s2 = inlined_call_operand.hbm [shape: f32[8,128], index: 2, kind: output, shape index: {}]
  %s3 = sld [smem:[#allocation0]]
  $region26: #{tpu_custom_call.1} parent=0
    _
  %s5 = ssub.s32 1, %s3
  %s6 = scalar_select 0, %s5, %s3
  $region1: #{tpu_custom_call.1} parent=0
    #allocation2 [shape = 'u8[4096]{0}', space=vmem, size = 0x1000, scoped, tag = 'input window, operand 0, single buffered']
    #allocation3 [shape = 's32[1]{0}', space=sflag, size = 0x4, scoped, tag = 'scoped memory for tpu_custom_call.1']
    #allocation4 [shape = 's32[1]{0}', space=sflag, size = 0x4, scoped, tag = 'scoped memory for tpu_custom_call.1']
    #allocation5 [shape = 'u8[4096]{0}', space=vmem, size = 0x1000, scoped, tag = 'input window, operand 1, single buffered']
    #allocation6 [shape = 's32[1]{0}', space=sflag, size = 0x4, scoped, tag = 'scoped memory for tpu_custom_call.1']
    #allocation7 [shape = 'u8[4096]{0}', space=vmem, size = 0x1000, scoped, tag = 'output window, operand 0, single buffered']
    %7 = vsyncpa [#allocation3], 0
    %8 = vsyncpa [#allocation6], 0
    %9 = vsyncpa [#allocation4], 0
    // Predicated region
    $region2: #{tpu_custom_call.1} parent=1 // pred_check
      _
    $region3: #{tpu_custom_call.1} parent=1 // pred_check_branch
      %11 = sbr.rel (0) target = $region5
    $region4: #{tpu_custom_call.1} parent=1 // pred_region
      %s13 = ssub.s32 128, 128
      %14 = vsyncadd [#allocation3], %s13
      %s16 = sshll.u32 [#allocation2], 4
      %s17 = int_to_ptr.vmem [resolvable:$true] %s16
      %19 = dma.hbm_to_vmem [thread:$0]  %s0, 128, %s17, [#allocation3]
    $region5: #{tpu_custom_call.1} parent=1 // pred_fallthru
      _
    // Predicated region
    $region6: #{tpu_custom_call.1} parent=1 // pred_check
      _
    $region7: #{tpu_custom_call.1} parent=1 // pred_check_branch
      %21 = sbr.rel (0) target = $region9
    $region8: #{tpu_custom_call.1} parent=1 // pred_region
      %s23 = ssub.s32 128, 128
      %24 = vsyncadd [#allocation6], %s23
      %s26 = sshll.u32 [#allocation5], 4
      %s27 = int_to_ptr.vmem [resolvable:$true] %s26
      %29 = dma.hbm_to_vmem [thread:$0]  %s1, 128, %s27, [#allocation6]
    $region9: #{tpu_custom_call.1} parent=1 // pred_fallthru
      _
    // Predicated region
    $region10: #{tpu_custom_call.1} parent=1 // pred_check
      _
    $region11: #{tpu_custom_call.1} parent=1 // pred_check_branch
      %31 = sbr.rel (0) target = $region13
    $region12: #{tpu_custom_call.1} parent=1 // pred_region
      %32 = dma.done [#allocation3], 128
    $region13: #{tpu_custom_call.1} parent=1 // pred_fallthru
      _
    // Predicated region
    $region14: #{tpu_custom_call.1} parent=1 // pred_check
      _
    $region15: #{tpu_custom_call.1} parent=1 // pred_check_branch
      %34 = sbr.rel (0) target = $region17
    $region16: #{tpu_custom_call.1} parent=1 // pred_region
      %35 = dma.done [#allocation6], 128
    $region17: #{tpu_custom_call.1} parent=1 // pred_fallthru
      _
    %v36 = vld [vmem:[#allocation2] sm:$0xff]
    %v37 = vld [vmem:[#allocation5] sm:$0xff]
    %v38 = vadd.f32 %v36, %v37
    %v39 = vmul.f32 %v38, 0.5
    %40 = vst [vmem:[#allocation7] sm:$0xff] %v39
    // Predicated region
    $region18: #{tpu_custom_call.1} parent=1 // pred_check
      _
    $region19: #{tpu_custom_call.1} parent=1 // pred_check_branch
      %42 = sbr.rel (0) target = $region21
    $region20: #{tpu_custom_call.1} parent=1 // pred_region
      %s44 = ssub.s32 128, 128
      %45 = vsyncadd [#allocation4], %s44
      %s47 = sshll.u32 [#allocation7], 4
      %s48 = int_to_ptr.vmem [resolvable:$true] %s47
      %50 = dma.vmem_to_hbm [thread:$0]  %s48, 128, %s2, [#allocation4]
    $region21: #{tpu_custom_call.1} parent=1 // pred_fallthru
      _
    // Predicated region
    $region22: #{tpu_custom_call.1} parent=1 // pred_check
      _
    $region23: #{tpu_custom_call.1} parent=1 // pred_check_branch
      %52 = sbr.rel (0) target = $region25
    $region24: #{tpu_custom_call.1} parent=1 // pred_region
      %53 = dma.done [#allocation4], 128
    $region25: #{tpu_custom_call.1} parent=1 // pred_fallthru
      _
    %54 = vsyncpa [#allocation3], 1
    %55 = vsyncpa [#allocation6], 1
    %56 = vsyncpa [#allocation4], 1

</llo_original>
